<compile_context>
chip_gen: v6e
topology: v6e:2x2x1
jax: 0.10.0
libtpu: 0.0.40
codegen_flags: <defaults>
</compile_context>

<pallas_src>
import numpy as np
import jax
import jax.numpy as jnp
from jax.experimental import pallas as pl
from jax.experimental.pallas import tpu as pltpu


# ---------------------------------------------------------------------------
# Parameter setup (matches the PyTorch buffer initialization; host-side, done
# once — this is not forward compute).
# ---------------------------------------------------------------------------
def make_positional_encoding(d_model: int, max_len: int, dtype=jnp.float32):
    """Sinusoidal PE table, shape (1, max_len, d_model), stored in `dtype`."""
    position = np.arange(0, max_len, dtype=np.float32)[:, None]            # (max_len, 1)
    div_term = np.exp(np.arange(0, d_model, 2, dtype=np.float32)
                      * (-np.log(10000.0) / d_model))                      # (ceil(d/2),)
    pe = np.zeros((1, max_len, d_model), dtype=np.float32)
    pe[0, :, 0::2] = np.sin(position * div_term)
    pe[0, :, 1::2] = np.cos(position * div_term[: d_model // 2])
    return jnp.asarray(pe, dtype=dtype)


# ---------------------------------------------------------------------------
# Pallas kernel: lane-dense broadcast add over a flattened (B, S*D) view.
# ---------------------------------------------------------------------------
_MIN_PALLAS_ELEMS = 16 * 1024      # below this, a fused XLA add wins (launch overhead)
_TARGET_TILE_ELEMS = 256 * 1024    # ~1 MiB per f32 buffer: near HBM-roofline plateau,
                                   # double-buffered footprint safe on v7x's smaller VMEM
_MAX_ROW_TILE = 256                # multiple of 8 (f32) and 16 (bf16) sublanes


def _pos_enc_kernel(x_ref, pe_ref, o_ref):
    # x_ref: (TR, TC) tile of the flattened (B, S*D) input
    # pe_ref: (1, TC) matching slice of the flattened positional table
    o_ref[...] = x_ref[...] + pe_ref[...]


def positional_encoding_forward(x: jax.Array, pe: jax.Array, *,
                                force_pallas: bool = False,
                                donate_x: bool = False) -> jax.Array:
    """x: (B, S, D); pe: (1, max_len, D). Returns x + pe[:, :S] (dtype of x)."""
    B, S, D = x.shape
    _, max_len, d_model = pe.shape
    if D != d_model:
        raise ValueError(f"d_model mismatch: x has {D}, pe has {d_model}")
    if S > max_len:
        raise ValueError(f"sequence length {S} exceeds max_len {max_len}")

    pe_s = pe[:, :S, :]
    if pe_s.dtype != x.dtype:
        # Prefer building the table in the model dtype up front (see
        # make_positional_encoding); this cast is a no-op in that case.
        pe_s = pe_s.astype(x.dtype)

    # Tiny inputs: let XLA fuse the add; Pallas launch overhead is not worth it.
    if not force_pallas and x.size < _MIN_PALLAS_ELEMS:
        return x + pe_s

    # Lane-dense 2D view (reshape of contiguous arrays is free).
    C = S * D
    x2 = x.reshape(B, C)
    pe2 = pe_s.reshape(1, C)

    # Row tile: full batch when small (block == full dim is always a legal
    # block shape), otherwise a multiple-of-8/16 tile.
    TR = B if B <= _MAX_ROW_TILE else _MAX_ROW_TILE

    # Column tile: full trailing dim if it fits the per-buffer budget, else the
    # largest multiple of 128 within budget (Pallas masks the tail block).
    tc_cap = max(128, ((_TARGET_TILE_ELEMS // TR) // 128) * 128)
    TC = C if C <= tc_cap else tc_cap

    # Columns outer, rows inner: pe's block index depends only on the column
    # block, so it stays resident in VMEM across the (innermost) row steps.
    grid = (pl.cdiv(C, TC), pl.cdiv(B, TR))

    out2 = pl.pallas_call(
        _pos_enc_kernel,
        out_shape=jax.ShapeDtypeStruct((B, C), x.dtype),
        grid=grid,
        in_specs=[
            pl.BlockSpec((TR, TC), lambda c, r: (r, c)),   # x tile
            pl.BlockSpec((1, TC), lambda c, r: (0, c)),    # broadcast pe tile (row-resident)
        ],
        out_specs=pl.BlockSpec((TR, TC), lambda c, r: (r, c)),
        compiler_params=pltpu.CompilerParams(
            dimension_semantics=("parallel", "parallel"),
        ),
        # Optional: alias x to the output when the caller no longer needs x.
        input_output_aliases=({0: 0} if donate_x else {}),
    )(x2, pe2)

    return out2.reshape(B, S, D)


# ---------------------------------------------------------------------------
# Demo / correctness check
# ---------------------------------------------------------------------------
if __name__ == "__main__":
    # Small shapes consistent with the module: batch=2, seq=8, d_model=32, max_len=16.
    B, S, D, MAX_LEN = 2, 8, 32, 16
    key = jax.random.PRNGKey(0)
    x = jax.random.normal(key, (B, S, D), dtype=jnp.float32)
    pe = make_positional_encoding(D, MAX_LEN, dtype=jnp.float32)
    ref = x + pe[:, :S, :]

    # 1) Small demo shape, forced through the Pallas kernel (exercises the kernel).
    out = jax.block_until_ready(positional_encoding_forward(x, pe, force_pallas=True))
    np.testing.assert_allclose(np.asarray(out), np.asarray(ref), rtol=1e-6, atol=1e-6)

    # 2) Same shape via auto-dispatch (falls back to the fused XLA add — same result).
    out_small = jax.block_until_ready(positional_encoding_forward(x, pe))
    np.testing.assert_allclose(np.asarray(out_small), np.asarray(ref), rtol=1e-6, atol=1e-6)

    # 3) Moderate shape that exercises the tiled, multi-block Pallas path
    #    (B=2, S=1024, D=256 -> C=262144, TC=131072, 2 column blocks).
    B2, S2, D2, MAX_LEN2 = 2, 1024, 256, 1024
    x2 = jax.random.normal(jax.random.PRNGKey(0), (B2, S2, D2), dtype=jnp.float32)
    pe2 = make_positional_encoding(D2, MAX_LEN2, dtype=jnp.float32)
    out2 = jax.block_until_ready(positional_encoding_forward(x2, pe2))
    ref2 = x2 + pe2[:, :S2, :]
    np.testing.assert_allclose(np.asarray(out2), np.asarray(ref2), rtol=1e-6, atol=1e-6)

    print("KERNEL_OK")
</pallas_src>

<mosaic_0001>
module attributes {stable_mosaic.version = 11 : i64} {
  func.func @_pos_enc_kernel(%arg0: i32, %arg1: i32, %arg2: memref<2x256xf32, #tpu.memory_space<vmem>>, %arg3: memref<1x256xf32, #tpu.memory_space<vmem>>, %arg4: memref<2x256xf32, #tpu.memory_space<vmem>>) attributes {dimension_semantics = [#tpu.dimension_semantics<parallel>, #tpu.dimension_semantics<parallel>], iteration_bounds = array<i64: 1, 1>, scalar_prefetch = 0 : i64, scratch_operands = 0 : i64, tpu.core_type = #tpu.core_type<tc>, window_params = [{transform_indices = @transform_0, window_bounds = array<i64: 2, 256>}, {transform_indices = @transform_1, window_bounds = array<i64: 1, 256>}, {transform_indices = @transform_2, window_bounds = array<i64: 2, 256>}]} {
    %c0 = arith.constant 0 : index
    %c0_0 = arith.constant 0 : index
    %0 = vector.load %arg2[%c0, %c0_0] : memref<2x256xf32, #tpu.memory_space<vmem>>, vector<2x256xf32>
    %c0_1 = arith.constant 0 : index
    %c0_2 = arith.constant 0 : index
    %1 = vector.load %arg3[%c0_1, %c0_2] : memref<1x256xf32, #tpu.memory_space<vmem>>, vector<1x256xf32>
    %2 = vector.broadcast %1 : vector<1x256xf32> to vector<2x256xf32>
    %3 = arith.addf %0, %2 : vector<2x256xf32>
    %c0_3 = arith.constant 0 : index
    %c0_4 = arith.constant 0 : index
    %4 = vector.load %arg4[%c0_3, %c0_4] : memref<2x256xf32, #tpu.memory_space<vmem>>, vector<2x256xf32>
    tpu.vector_store %arg4[%c0_3, %c0_4], %3 {strides = array<i32>} : memref<2x256xf32, #tpu.memory_space<vmem>>, vector<2x256xf32>,
    return
  }
  func.func @transform_0(%arg0: i32, %arg1: i32) -> (i32, i32) {
    %c0_i32 = arith.constant 0 : i32
    return %arg1, %arg0 : i32, i32
  }
  func.func @transform_1(%arg0: i32, %arg1: i32) -> (i32, i32) {
    %c0_i32 = arith.constant 0 : i32
    %c0_i32_0 = arith.constant 0 : i32
    return %c0_i32, %arg0 : i32, i32
  }
  func.func @transform_2(%arg0: i32, %arg1: i32) -> (i32, i32) {
    %c0_i32 = arith.constant 0 : i32
    return %arg1, %arg0 : i32, i32
  }
}

</mosaic_0001>

<llo_original>
// kernel: tpu_custom_call.1
$region0: #{tpu_custom_call.1}
  #allocation0 [shape = 'u32[]', space=smem, size = 0x4, offset = 0x4, fixed_abs, tag = 'smem constant byte address 0x4 - core index']
  #allocation1 [shape = 'u32[144,128]{1,0:T(1,128)}', space=vmem, size = 0x12000, scoped, tag = 'internal scratch']
  %s0 = inlined_call_operand.hbm [shape: f32[2,256], index: 0, kind: input, shape index: {}]
  %s1 = inlined_call_operand.hbm [shape: f32[1,256], index: 1, kind: input, shape index: {}]
  %s2 = inlined_call_operand.hbm [shape: f32[2,256], index: 2, kind: output, shape index: {}]
  %s3 = sld [smem:[#allocation0]]
  $region26: #{tpu_custom_call.1} parent=0
    _
  %s5 = ssub.s32 1, %s3
  %s6 = scalar_select 0, %s5, %s3
  $region1: #{tpu_custom_call.1} parent=0
    #allocation2 [shape = 'u8[2048]{0}', space=vmem, size = 0x800, scoped, tag = 'input window, operand 0, single buffered']
    #allocation3 [shape = 's32[1]{0}', space=sflag, size = 0x4, scoped, tag = 'scoped memory for tpu_custom_call.1']
    #allocation4 [shape = 's32[1]{0}', space=sflag, size = 0x4, scoped, tag = 'scoped memory for tpu_custom_call.1']
    #allocation5 [shape = 'u8[1024]{0}', space=vmem, size = 0x400, scoped, tag = 'input window, operand 1, single buffered']
    #allocation6 [shape = 's32[1]{0}', space=sflag, size = 0x4, scoped, tag = 'scoped memory for tpu_custom_call.1']
    #allocation7 [shape = 'u8[2048]{0}', space=vmem, size = 0x800, scoped, tag = 'output window, operand 0, single buffered']
    %7 = vsyncpa [#allocation3], 0
    %8 = vsyncpa [#allocation6], 0
    %9 = vsyncpa [#allocation4], 0
    // Predicated region
    $region2: #{tpu_custom_call.1} parent=1 // pred_check
      _
    $region3: #{tpu_custom_call.1} parent=1 // pred_check_branch
      %11 = sbr.rel (0) target = $region5
    $region4: #{tpu_custom_call.1} parent=1 // pred_region
      %s13 = ssub.s32 64, 64
      %14 = vsyncadd [#allocation3], %s13
      %s16 = sshll.u32 [#allocation2], 4
      %s17 = int_to_ptr.vmem [resolvable:$true] %s16
      %19 = dma.hbm_to_vmem [thread:$0]  %s0, 64, %s17, [#allocation3]
    $region5: #{tpu_custom_call.1} parent=1 // pred_fallthru
      _
    // Predicated region
    $region6: #{tpu_custom_call.1} parent=1 // pred_check
      _
    $region7: #{tpu_custom_call.1} parent=1 // pred_check_branch
      %21 = sbr.rel (0) target = $region9
    $region8: #{tpu_custom_call.1} parent=1 // pred_region
      %s23 = ssub.s32 32, 32
      %24 = vsyncadd [#allocation6], %s23
      %s26 = sshll.u32 [#allocation5], 4
      %s27 = int_to_ptr.vmem [resolvable:$true] %s26
      %29 = dma.hbm_to_vmem [thread:$0]  %s1, 32, %s27, [#allocation6]
    $region9: #{tpu_custom_call.1} parent=1 // pred_fallthru
      _
    // Predicated region
    $region10: #{tpu_custom_call.1} parent=1 // pred_check
      _
    $region11: #{tpu_custom_call.1} parent=1 // pred_check_branch
      %31 = sbr.rel (0) target = $region13
    $region12: #{tpu_custom_call.1} parent=1 // pred_region
      %32 = dma.done [#allocation3], 64
    $region13: #{tpu_custom_call.1} parent=1 // pred_fallthru
      _
    // Predicated region
    $region14: #{tpu_custom_call.1} parent=1 // pred_check
      _
    $region15: #{tpu_custom_call.1} parent=1 // pred_check_branch
      %34 = sbr.rel (0) target = $region17
    $region16: #{tpu_custom_call.1} parent=1 // pred_region
      %35 = dma.done [#allocation6], 32
    $region17: #{tpu_custom_call.1} parent=1 // pred_fallthru
      _
    %v36 = vld [vmem:[#allocation2] sm:$0xf]
    %v37 = vld [vmem:[#allocation5] sm:$0x3]
    %v39 = vlaneseq
    %v40 = vshrl.u32 %v39, 7
    %v41 = vsub.s32 0, %v40
    %v42 = vrot.slane %v37, %v41
    %v43 = vlaneseq
    %v44 = vshrl.u32 %v43, 7
    %v45 = vsub.s32 1, %v44
    %v46 = vrot.slane %v37, %v45
    %v47 = vcombine.low %v42, %v46
    %v49 = vunpack.c.l.s4 1983009808
    %v50 = vunpack.c.0.s8 %v49
    %v51 = vlaneseq
    %v52 = vshrl.u32 %v51, 7
    %v53 = vsub.s32 %v50, %v52
    %v54 = vrot.slane %v47, %v53
    %v56 = vadd.f32 %v36, %v54
    %57 = vst [vmem:[#allocation7] sm:$0xf] %v56
    // Predicated region
    $region18: #{tpu_custom_call.1} parent=1 // pred_check
      _
    $region19: #{tpu_custom_call.1} parent=1 // pred_check_branch
      %59 = sbr.rel (0) target = $region21
    $region20: #{tpu_custom_call.1} parent=1 // pred_region
      %s61 = ssub.s32 64, 64
      %62 = vsyncadd [#allocation4], %s61
      %s64 = sshll.u32 [#allocation7], 4
      %s65 = int_to_ptr.vmem [resolvable:$true] %s64
      %67 = dma.vmem_to_hbm [thread:$0]  %s65, 64, %s2, [#allocation4]
    $region21: #{tpu_custom_call.1} parent=1 // pred_fallthru
      _
    // Predicated region
    $region22: #{tpu_custom_call.1} parent=1 // pred_check
      _
    $region23: #{tpu_custom_call.1} parent=1 // pred_check_branch
      %69 = sbr.rel (0) target = $region25
    $region24: #{tpu_custom_call.1} parent=1 // pred_region
      %70 = dma.done [#allocation4], 64
    $region25: #{tpu_custom_call.1} parent=1 // pred_fallthru
      _
    %71 = vsyncpa [#allocation3], 1
    %72 = vsyncpa [#allocation6], 1
    %73 = vsyncpa [#allocation4], 1

</llo_original>
